<compile_context>
chip_gen: v5e
topology: v5e:2x2
jax: 0.10.0
libtpu: 0.0.40
codegen_flags: <defaults>
</compile_context>

<pallas_src>
import jax
import jax.numpy as jnp
from jax.experimental import pallas as pl
from jax.experimental.pallas import tpu as pltpu


def _round_up(x: int, m: int) -> int:
    return (x + m - 1) // m * m


def layer_kernel(x_ref, w1sq_ref, wlinT_ref, b_ref, o_ref):
    # x_ref:     (TM, D)      raw flattened NCHW input tile (no padding)
    # w1sq_ref:  (1, D)       optical weight squared, tiled over channels
    # wlinT_ref: (D, OUT_P)   linear weight transposed, pre-scaled row-wise by w1
    # b_ref:     (1, OUT_P)   linear bias (zero-padded)
    # o_ref:     (TM, OUT_P)
    x = x_ref[...]

    # ||x * w1||^2 == sum(x^2 * w1^2) per row.
    sq = jnp.sum(x * x * w1sq_ref[...], axis=1, keepdims=True)          # (TM, 1)
    norm = jnp.sqrt(sq) + 0.0001                                        # eps on the norm
    inv_norm = pl.reciprocal(norm, approx=False)                        # exact, hidden under DMA

    # (x*w1) @ W.T == x @ (w1[:,None] * W.T); normalization deferred to the result.
    y = jnp.dot(x, wlinT_ref[...], preferred_element_type=jnp.float32)  # (TM, OUT_P)
    y = y * inv_norm + b_ref[...]
    o_ref[...] = jnp.maximum(y, 0.0).astype(o_ref.dtype)


def layer_forward(x_nchw, weight1, lin_weight, lin_bias, *, tm_max=1024):
    """x_nchw: (B, C, 30, 30); weight1: (30, 30);
    lin_weight: (out_dim, C*900) [PyTorch Linear layout]; lin_bias: (out_dim,)"""
    B, C, H, W = x_nchw.shape
    D = C * H * W
    out_dim = lin_weight.shape[0]

    LANE, SUBLANE = 128, 8
    out_pad = _round_up(out_dim, LANE)  # 32 -> 128 (lane-dense output stores)

    # TM: multiple of 8, capped at tm_max, and for large B chosen so the grid has
    # >= 2 steps (v7x two-TensorCore sharding of the parallel batch axis).
    TM = min(tm_max, max(SUBLANE, _round_up((B + 1) // 2, SUBLANE)))
    grid = (pl.cdiv(B, TM),)

    # --- plain-JAX glue: all tiny / free (no full-array pad of x) ---
    x_flat = x_nchw.reshape(B, D).astype(jnp.float32)                         # free view

    w1_row = jnp.tile(weight1.reshape(1, H * W), (1, C)).astype(jnp.float32)  # (1, D)
    w1sq = w1_row * w1_row                                                    # (1, D)

    wlinT = lin_weight.T.astype(jnp.float32)                                  # (D, out_dim)
    wlinT = w1_row.reshape(D, 1) * wlinT                                      # fold optical weight
    wlinT = jnp.pad(wlinT, ((0, 0), (0, out_pad - out_dim)))                  # (D, OUT_P)

    b = jnp.pad(lin_bias.astype(jnp.float32), (0, out_pad - out_dim))
    b = b.reshape(1, out_pad)

    out_padded = pl.pallas_call(
        layer_kernel,
        out_shape=jax.ShapeDtypeStruct((B, out_pad), jnp.float32),
        grid_spec=pltpu.PrefetchScalarGridSpec(
            num_scalar_prefetch=0,
            grid=grid,
            in_specs=[
                pl.BlockSpec((TM, D), lambda i: (i, 0)),            # x: streamed per tile
                pl.BlockSpec((1, D), lambda i: (0, 0)),             # w1^2: grid-invariant
                pl.BlockSpec((D, out_pad), lambda i: (0, 0)),       # scaled W.T: grid-invariant
                pl.BlockSpec((1, out_pad), lambda i: (0, 0)),       # bias: grid-invariant
            ],
            out_specs=pl.BlockSpec((TM, out_pad), lambda i: (i, 0)),
        ),
        compiler_params=pltpu.CompilerParams(
            dimension_semantics=("parallel",),
            vmem_limit_bytes=48 * 1024 * 1024,
        ),
        cost_estimate=pl.CostEstimate(
            flops=2 * B * D * out_pad + 3 * B * D,
            transcendentals=2 * B,
            bytes_accessed=4 * (B * D + D * out_pad + B * out_pad),
        ),
    )(x_flat, w1sq, wlinT, b)

    # Slice off output-channel padding (rows beyond B in a partial last tile are
    # never written back by Pallas, so no batch slice is needed).
    return out_padded[:, :out_dim]


def reference_forward(x_nchw, weight1, lin_weight, lin_bias):
    B, C, H, W = x_nchw.shape
    xw = x_nchw * weight1[None, None, :, :]
    xf = xw.reshape(B, -1)
    x_dir = xf / (jnp.linalg.norm(xf, ord=2, axis=1, keepdims=True) + 0.0001)
    y = x_dir @ lin_weight.T + lin_bias[None, :]
    return jnp.maximum(y, 0.0)


if __name__ == "__main__":
    # Spatial must be 30x30 (Optical_Layer weight is hardcoded (30, 30)).
    B, C, H, W = 2, 2, 30, 30
    in_dim = C * H * W          # 1800
    out_dim = 32

    key = jax.random.PRNGKey(0)
    k_x, k_w1, k_wl, k_bl = jax.random.split(key, 4)

    x = jax.random.normal(k_x, (B, C, H, W), dtype=jnp.float32)

    # Optical_Layer: nn.init.uniform_(weight1, a=0, b=1)
    weight1 = jax.random.uniform(k_w1, (30, 30), dtype=jnp.float32, minval=0.0, maxval=1.0)

    # Postprocessing_Layer = nn.Linear(in_dim, out_dim): U(-1/sqrt(in_dim), 1/sqrt(in_dim))
    bound = 1.0 / (in_dim ** 0.5)
    lin_weight = jax.random.uniform(k_wl, (out_dim, in_dim), dtype=jnp.float32,
                                    minval=-bound, maxval=bound)
    lin_bias = jax.random.uniform(k_bl, (out_dim,), dtype=jnp.float32,
                                  minval=-bound, maxval=bound)

    out = layer_forward(x, weight1, lin_weight, lin_bias)
    out = jax.block_until_ready(out)

    ref = reference_forward(x, weight1, lin_weight, lin_bias)
    assert out.shape == (B, out_dim), out.shape
    assert jnp.allclose(out, ref, atol=1e-4, rtol=1e-4), float(jnp.max(jnp.abs(out - ref)))

    print("KERNEL_OK")
</pallas_src>

<mosaic_0001>
module attributes {stable_mosaic.version = 11 : i64} {
  func.func @layer_kernel(%arg0: i32, %arg1: memref<8x1800xf32, #tpu.memory_space<vmem>>, %arg2: memref<1x1800xf32, #tpu.memory_space<vmem>>, %arg3: memref<1800x128xf32, #tpu.memory_space<vmem>>, %arg4: memref<1x128xf32, #tpu.memory_space<vmem>>, %arg5: memref<8x128xf32, #tpu.memory_space<vmem>>) attributes {dimension_semantics = [#tpu.dimension_semantics<parallel>], iteration_bounds = array<i64: 1>, scalar_prefetch = 0 : i64, scratch_operands = 0 : i64, tpu.core_type = #tpu.core_type<tc>, window_params = [{transform_indices = @transform_0, window_bounds = array<i64: 8, 1800>}, {pipeline_mode = #tpu.pipeline_mode<synchronous>, transform_indices = @transform_1, window_bounds = array<i64: 1, 1800>}, {pipeline_mode = #tpu.pipeline_mode<synchronous>, transform_indices = @transform_2, window_bounds = array<i64: 1800, 128>}, {pipeline_mode = #tpu.pipeline_mode<synchronous>, transform_indices = @transform_3, window_bounds = array<i64: 1, 128>}, {transform_indices = @transform_4, window_bounds = array<i64: 8, 128>}]} {
    %c0 = arith.constant 0 : index
    %c0_0 = arith.constant 0 : index
    %0 = vector.load %arg1[%c0, %c0_0] : memref<8x1800xf32, #tpu.memory_space<vmem>>, vector<8x1800xf32>
    %1 = arith.mulf %0, %0 : vector<8x1800xf32>
    %c0_1 = arith.constant 0 : index
    %c0_2 = arith.constant 0 : index
    %2 = vector.load %arg2[%c0_1, %c0_2] : memref<1x1800xf32, #tpu.memory_space<vmem>>, vector<1x1800xf32>
    %3 = vector.broadcast %2 : vector<1x1800xf32> to vector<8x1800xf32>
    %4 = arith.mulf %1, %3 : vector<8x1800xf32>
    %cst = arith.constant dense<0.000000e+00> : vector<8xf32>
    %5 = vector.multi_reduction <add>, %4, %cst [1] : vector<8x1800xf32> to vector<8xf32>
    %6 = vector.shape_cast %5 : vector<8xf32> to vector<8x1xf32>
    %7 = math.sqrt %6 : vector<8x1xf32>
    %cst_3 = arith.constant 9.99999974E-5 : f32
    %8 = vector.broadcast %cst_3 : f32 to vector<8x1xf32>
    %9 = arith.addf %7, %8 : vector<8x1xf32>
    %10 = tpu.reciprocal %9 : vector<8x1xf32> -> vector<8x1xf32>
    %c0_4 = arith.constant 0 : index
    %c0_5 = arith.constant 0 : index
    %11 = vector.load %arg3[%c0_4, %c0_5] : memref<1800x128xf32, #tpu.memory_space<vmem>>, vector<1800x128xf32>
    %cst_6 = arith.constant dense<0.000000e+00> : vector<8x128xf32>
    %12 = tpu.matmul %0, %11, %cst_6 {dimension_numbers = #tpu.dot_dimension_numbers<[1], [0], [0], [1], [0, 0, 1, 1], [], []>} : vector<8x1800xf32>, vector<1800x128xf32>, vector<8x128xf32> -> vector<8x128xf32>
    %13 = vector.broadcast %10 : vector<8x1xf32> to vector<8x128xf32>
    %14 = arith.mulf %12, %13 : vector<8x128xf32>
    %c0_7 = arith.constant 0 : index
    %c0_8 = arith.constant 0 : index
    %15 = vector.load %arg4[%c0_7, %c0_8] : memref<1x128xf32, #tpu.memory_space<vmem>>, vector<1x128xf32>
    %16 = vector.broadcast %15 : vector<1x128xf32> to vector<8x128xf32>
    %17 = arith.addf %14, %16 : vector<8x128xf32>
    %cst_9 = arith.constant 0.000000e+00 : f32
    %18 = vector.broadcast %cst_9 : f32 to vector<8x128xf32>
    %19 = arith.maximumf %17, %18 : vector<8x128xf32>
    %c0_10 = arith.constant 0 : index
    %c0_11 = arith.constant 0 : index
    %20 = vector.load %arg5[%c0_10, %c0_11] : memref<8x128xf32, #tpu.memory_space<vmem>>, vector<8x128xf32>
    tpu.vector_store %arg5[%c0_10, %c0_11], %19 {strides = array<i32>} : memref<8x128xf32, #tpu.memory_space<vmem>>, vector<8x128xf32>,
    return
  }
  func.func @transform_0(%arg0: i32) -> (i32, i32) {
    %c0_i32 = arith.constant 0 : i32
    %c0_i32_0 = arith.constant 0 : i32
    return %arg0, %c0_i32 : i32, i32
  }
  func.func @transform_1(%arg0: i32) -> (i32, i32) {
    %c0_i32 = arith.constant 0 : i32
    %c0_i32_0 = arith.constant 0 : i32
    %c0_i32_1 = arith.constant 0 : i32
    return %c0_i32, %c0_i32_0 : i32, i32
  }
  func.func @transform_2(%arg0: i32) -> (i32, i32) {
    %c0_i32 = arith.constant 0 : i32
    %c0_i32_0 = arith.constant 0 : i32
    %c0_i32_1 = arith.constant 0 : i32
    return %c0_i32, %c0_i32_0 : i32, i32
  }
  func.func @transform_3(%arg0: i32) -> (i32, i32) {
    %c0_i32 = arith.constant 0 : i32
    %c0_i32_0 = arith.constant 0 : i32
    %c0_i32_1 = arith.constant 0 : i32
    return %c0_i32, %c0_i32_0 : i32, i32
  }
  func.func @transform_4(%arg0: i32) -> (i32, i32) {
    %c0_i32 = arith.constant 0 : i32
    %c0_i32_0 = arith.constant 0 : i32
    return %arg0, %c0_i32 : i32, i32
  }
}

</mosaic_0001>

<llo_original>
// kernel: tpu_custom_call.1
$region0: #{tpu_custom_call.1}
  #allocation0 [shape = 'u32[]', space=smem, size = 0x4, offset = 0x4, fixed_abs, tag = 'smem constant byte address 0x4 - core index']
  #allocation1 [shape = 'u32[72,128]{1,0:T(1,128)}', space=vmem, size = 0x9000, scoped, tag = 'internal scratch']
  %s0 = inlined_call_operand.hbm [shape: f32[2,1800], index: 0, kind: input, shape index: {}]
  %s1 = inlined_call_operand.hbm [shape: f32[1,1800], index: 1, kind: input, shape index: {}]
  %s2 = inlined_call_operand.hbm [shape: f32[1800,128], index: 2, kind: input, shape index: {}]
  %s3 = inlined_call_operand.vmem [shape: f32[1,128], index: 3, kind: input, shape index: {}]
  %s4 = inlined_call_operand.hbm [shape: f32[2,128], index: 4, kind: output, shape index: {}]
  %s5 = sld [smem:[#allocation0]]
  $region38: #{tpu_custom_call.1} parent=0
    _
  %s7 = ssub.s32 1, %s5
  %s8 = scalar_select 0, %s7, %s5
  $region1: #{tpu_custom_call.1} parent=0
    #allocation2 [shape = 'u8[61440]{0}', space=vmem, size = 0xf000, scoped, tag = 'input window, operand 0, single buffered']
    #allocation3 [shape = 's32[1]{0}', space=sflag, size = 0x4, scoped, tag = 'scoped memory for tpu_custom_call.1']
    #allocation4 [shape = 's32[1]{0}', space=sflag, size = 0x4, scoped, tag = 'scoped memory for tpu_custom_call.1']
    #allocation5 [shape = 'u8[7680]{0}', space=vmem, size = 0x2000, scoped, tag = 'input window, operand 1, single buffered']
    #allocation6 [shape = 's32[1]{0}', space=sflag, size = 0x4, scoped, tag = 'scoped memory for tpu_custom_call.1']
    #allocation7 [shape = 'u8[921600]{0}', space=vmem, size = 0xe1000, scoped, tag = 'input window, operand 2, single buffered']
    #allocation8 [shape = 'u8[4096]{0}', space=vmem, size = 0x1000, scoped, tag = 'output window, operand 0, single buffered']
    %9 = vsyncpa [#allocation3], 0
    %10 = vsyncpa [#allocation6], 0
    %11 = vsyncpa [#allocation4], 0
    // Predicated region
    $region2: #{tpu_custom_call.1} parent=1 // pred_check
      _
    $region3: #{tpu_custom_call.1} parent=1 // pred_check_branch
      %13 = sbr.rel (0) target = $region5
    $region4: #{tpu_custom_call.1} parent=1 // pred_region
      %15 = vsyncadd [#allocation3], 1440
      %s16 = sshll.u32 %s0, 4
      %s17 = int_to_ptr.hbm [resolvable:$true] %s16
      %s18 = sshll.u32 [#allocation2], 4
      %s19 = int_to_ptr.vmem [resolvable:$true] %s18
      %24 = dma.hbm_to_vmem [thread:$0]  %s17, 480, %s19, [#allocation3], 480, 480, 30
    $region5: #{tpu_custom_call.1} parent=1 // pred_fallthru
      _
    // Predicated region
    $region6: #{tpu_custom_call.1} parent=1 // pred_check
      _
    $region7: #{tpu_custom_call.1} parent=1 // pred_check_branch
      %26 = sbr.rel (0) target = $region9
    $region8: #{tpu_custom_call.1} parent=1 // pred_region
      %28 = vsyncadd [#allocation6], 0
      %s30 = sshll.u32 %s1, 4
      %s31 = int_to_ptr.hbm [resolvable:$true] %s30
      %s32 = sshll.u32 [#allocation5], 4
      %s33 = int_to_ptr.vmem [resolvable:$true] %s32
      %35 = dma.hbm_to_vmem [thread:$0]  %s31, 240, %s33, [#allocation6]
    $region9: #{tpu_custom_call.1} parent=1 // pred_fallthru
      _
    // Predicated region
    $region10: #{tpu_custom_call.1} parent=1 // pred_check
      _
    $region11: #{tpu_custom_call.1} parent=1 // pred_check_branch
      %37 = sbr.rel (0) target = $region13
    $region12: #{tpu_custom_call.1} parent=1 // pred_region
      %39 = vsyncadd [#allocation6], 0
      %s40 = sshll.u32 %s2, 4
      %s41 = int_to_ptr.hbm [resolvable:$true] %s40
      %s42 = sshll.u32 [#allocation7], 4
      %s43 = int_to_ptr.vmem [resolvable:$true] %s42
      %48 = dma.hbm_to_vmem [thread:$0]  %s41, 28800, %s43, [#allocation6], 128, 128, 8
    $region13: #{tpu_custom_call.1} parent=1 // pred_fallthru
      _
    // Predicated region
    $region14: #{tpu_custom_call.1} parent=1 // pred_check
      _
    $region15: #{tpu_custom_call.1} parent=1 // pred_check_branch
      %50 = sbr.rel (0) target = $region17
    $region16: #{tpu_custom_call.1} parent=1 // pred_region
      _
    $region17: #{tpu_custom_call.1} parent=1 // pred_fallthru
      _
    // Predicated region
    $region18: #{tpu_custom_call.1} parent=1 // pred_check
      _
    $region19: #{tpu_custom_call.1} parent=1 // pred_check_branch
      %52 = sbr.rel (0) target = $region21
    $region20: #{tpu_custom_call.1} parent=1 // pred_region
      %54 = dma.done [#allocation3], 1920
    $region21: #{tpu_custom_call.1} parent=1 // pred_fallthru
      _
    // Predicated region
    $region22: #{tpu_custom_call.1} parent=1 // pred_check
      _
    $region23: #{tpu_custom_call.1} parent=1 // pred_check_branch
      %56 = sbr.rel (0) target = $region25
    $region24: #{tpu_custom_call.1} parent=1 // pred_region
      %58 = dma.done [#allocation6], 240
    $region25: #{tpu_custom_call.1} parent=1 // pred_fallthru
      _
    // Predicated region
    $region26: #{tpu_custom_call.1} parent=1 // pred_check
      _
    $region27: #{tpu_custom_call.1} parent=1 // pred_check_branch
      %60 = sbr.rel (0) target = $region29
    $region28: #{tpu_custom_call.1} parent=1 // pred_region
      %62 = dma.done [#allocation6], 28800
    $region29: #{tpu_custom_call.1} parent=1 // pred_fallthru
      _
    %v63 = vld [vmem:[#allocation2] sm:$0xff]
    %v64 = vld [vmem:[#allocation2 + $0x8] sm:$0xff]
    %v65 = vld [vmem:[#allocation2 + $0x10] sm:$0xff]
    %v66 = vld [vmem:[#allocation2 + $0x18] sm:$0x3f]
    %v67 = vld [vmem:[#allocation2 + $0x1e] sm:$0xff]
    %v68 = vld [vmem:[#allocation2 + $0x26] sm:$0xff]
    %v69 = vld [vmem:[#allocation2 + $0x2e] sm:$0xff]
    %v70 = vld [vmem:[#allocation2 + $0x36] sm:$0x3f]
    %v71 = vld [vmem:[#allocation2 + $0x3c] sm:$0xff]
    %v72 = vld [vmem:[#allocation2 + $0x44] sm:$0xff]
    %v73 = vld [vmem:[#allocation2 + $0x4c] sm:$0xff]
    %v74 = vld [vmem:[#allocation2 + $0x54] sm:$0x3f]
    %v75 = vld [vmem:[#allocation2 + $0x5a] sm:$0xff]
    %v76 = vld [vmem:[#allocation2 + $0x62] sm:$0xff]
    %v77 = vld [vmem:[#allocation2 + $0x6a] sm:$0xff]
    %v78 = vld [vmem:[#allocation2 + $0x72] sm:$0x3f]
    %v79 = vmul.f32 %v63, %v63
    %v80 = vmul.f32 %v64, %v64
    %v81 = vmul.f32 %v65, %v65
    %v82 = vmul.f32 %v66, %v66
    %v83 = vmul.f32 %v67, %v67
    %v84 = vmul.f32 %v68, %v68
    %v85 = vmul.f32 %v69, %v69
    %v86 = vmul.f32 %v70, %v70
    %v87 = vmul.f32 %v71, %v71
    %v88 = vmul.f32 %v72, %v72
    %v89 = vmul.f32 %v73, %v73
    %v90 = vmul.f32 %v74, %v74
    %v91 = vmul.f32 %v75, %v75
    %v92 = vmul.f32 %v76, %v76
    %v93 = vmul.f32 %v77, %v77
    %v94 = vmul.f32 %v78, %v78
    %v95 = vld [vmem:[#allocation5] sm:$0xff]
    %v96 = vld [vmem:[#allocation5 + $0x8] sm:$0x7f]
    %v99 = vperm.slane %v95, 0
    %v100 = vperm.slane %v95, 1
    %v101 = vperm.slane %v95, 2
    %v102 = vperm.slane %v95, 3
    %v103 = vperm.slane %v95, 4
    %v104 = vperm.slane %v95, 5
    %v105 = vperm.slane %v95, 6
    %v106 = vperm.slane %v95, 7
    %v107 = vperm.slane %v96, 0
    %v108 = vperm.slane %v96, 1
    %v109 = vperm.slane %v96, 2
    %v110 = vperm.slane %v96, 3
    %v111 = vperm.slane %v96, 4
    %v112 = vperm.slane %v96, 5
    %v113 = vperm.slane %v96, 6
    %v114 = vrot.slane %v100, 6
    %v115 = vrot.slane %v101, 4
    %v116 = vrot.slane %v102, 2
    %v117 = vrot.slane %v104, 6
    %v118 = vrot.slane %v105, 4
    %v119 = vrot.slane %v106, 2
    %v120 = vrot.slane %v108, 6
    %v121 = vrot.slane %v109, 4
    %v122 = vrot.slane %v110, 2
    %v123 = vrot.slane %v112, 6
    %v124 = vrot.slane %v113, 4
    %vm125 = vcmask 1041408
    %v126 = vsel %vm125, %v99, %v114
    %vm127 = vcmask 1045508
    %v128 = vsel %vm127, %v115, %v116
    %vm129 = vcmask 1043456
    %v130 = vsel %vm129, %v126, %v128
    %v131 = vsel %vm125, %v103, %v117
    %v132 = vsel %vm127, %v118, %v119
    %v133 = vsel %vm129, %v131, %v132
    %v134 = vsel %vm125, %v107, %v120
    %v135 = vsel %vm127, %v121, %v122
    %v136 = vsel %vm129, %v134, %v135
    %v137 = vsel %vm125, %v111, %v123
    %v138 = vsel %vm129, %v137, %v124
    %vm139 = vcmask 1043458
    %v140 = vsel %vm139, %v99, %v114
    %vm141 = vcmask 1045504
    %v142 = vsel %vm141, %v116, %v115
    %vm143 = vcmask 1045506
    %v144 = vsel %vm143, %v140, %v142
    %v145 = vrot.slane %v144, 2
    %v146 = vsel %vm139, %v103, %v117
    %v147 = vsel %vm141, %v119, %v118
    %v148 = vsel %vm143, %v146, %v147
    %v149 = vrot.slane %v148, 2
    %v150 = vsel %vm139, %v107, %v120
    %v151 = vsel %vm141, %v122, %v121
    %v152 = vsel %vm143, %v150, %v151
    %v153 = vrot.slane %v152, 2
    %v154 = vsel %vm139, %v111, %v123
    %v155 = vsel %vm143, %v154, %v124
    %v156 = vrot.slane %v155, 2
    %v157 = vsel %vm127, %v99, %v114
    %v158 = vsel %vm125, %v115, %v116
    %v159 = vsel %vm129, %v158, %v157
    %v160 = vrot.slane %v159, 4
    %v161 = vsel %vm127, %v103, %v117
    %v162 = vsel %vm125, %v118, %v119
    %v163 = vsel %vm129, %v162, %v161
    %v164 = vrot.slane %v163, 4
    %v165 = vsel %vm127, %v107, %v120
    %v166 = vsel %vm125, %v121, %v122
    %v167 = vsel %vm129, %v166, %v165
    %v168 = vrot.slane %v167, 4
    %v169 = vsel %vm127, %v111, %v123
    %v170 = vsel %vm129, %v124, %v169
    %v171 = vrot.slane %v170, 4
    %v172 = vsel %vm141, %v114, %v99
    %v173 = vsel %vm139, %v115, %v116
    %v174 = vsel %vm143, %v173, %v172
    %v175 = vrot.slane %v174, 6
    %v176 = vsel %vm141, %v117, %v103
    %v177 = vsel %vm139, %v118, %v119
    %v178 = vsel %vm143, %v177, %v176
    %v179 = vrot.slane %v178, 6
    %v180 = vsel %vm141, %v120, %v107
    %v181 = vsel %vm139, %v121, %v122
    %v182 = vsel %vm143, %v181, %v180
    %v183 = vrot.slane %v182, 6
    %v184 = vsel %vm141, %v123, %v111
    %v185 = vsel %vm143, %v124, %v184
    %v186 = vrot.slane %v185, 6
    %v203 = vmul.f32 %v79, %v130
    %v204 = vmul.f32 %v80, %v133
    %v205 = vmul.f32 %v81, %v136
    %v206 = vmul.f32 %v82, %v138
    %v207 = vmul.f32 %v83, %v145
    %v208 = vmul.f32 %v84, %v149
    %v209 = vmul.f32 %v85, %v153
    %v210 = vmul.f32 %v86, %v156
    %v211 = vmul.f32 %v87, %v160
    %v212 = vmul.f32 %v88, %v164
    %v213 = vmul.f32 %v89, %v168
    %v214 = vmul.f32 %v90, %v171
    %v215 = vmul.f32 %v91, %v175
    %v216 = vmul.f32 %v92, %v179
    %v217 = vmul.f32 %v93, %v183
    %v218 = vmul.f32 %v94, %v186
    %235 = vst [vmem:[#allocation1] ss:$4 sm:$0xff] %v203
    %s236 = scalar_lea.vmem [#allocation1], 1
    %237 = vst [vmem:[%s236] ss:$4 sm:$0xff] %v207
    %s238 = scalar_lea.vmem [#allocation1], 2
    %239 = vst [vmem:[%s238] ss:$4 sm:$0xff] %v211
    %s240 = scalar_lea.vmem [#allocation1], 3
    %241 = vst [vmem:[%s240] ss:$4 sm:$0xff] %v215
    %s242 = scalar_lea.vmem [#allocation1], 32
    %243 = vst [vmem:[%s242] ss:$4 sm:$0xff] %v204
    %s244 = scalar_lea.vmem [#allocation1], 33
    %245 = vst [vmem:[%s244] ss:$4 sm:$0xff] %v208
    %s246 = scalar_lea.vmem [#allocation1], 34
    %247 = vst [vmem:[%s246] ss:$4 sm:$0xff] %v212
    %s248 = scalar_lea.vmem [#allocation1], 35
    %249 = vst [vmem:[%s248] ss:$4 sm:$0xff] %v216
    %v250 = vld.sshfl [vmem:[#allocation1] sm:$0xff pattern:$0x73625140]
    %v251 = vld.sshfl [vmem:[#allocation1 + $0x8] sm:$0xff pattern:$0x73625140]
    %v252 = vld.sshfl [vmem:[#allocation1 + $0x10] sm:$0xff pattern:$0x73625140]
    %v253 = vld.sshfl [vmem:[#allocation1 + $0x18] sm:$0xff pattern:$0x73625140]
    %v254 = vld.sshfl [vmem:[#allocation1 + $0x20] sm:$0xff pattern:$0x73625140]
    %v255 = vld.sshfl [vmem:[#allocation1 + $0x28] sm:$0xff pattern:$0x73625140]
    %v256 = vld.sshfl [vmem:[#allocation1 + $0x30] sm:$0xff pattern:$0x73625140]
    %v257 = vld.sshfl [vmem:[#allocation1 + $0x38] sm:$0xff pattern:$0x73625140]
    %258 = vst [vmem:[#allocation1] ss:$4 sm:$0xff] %v205
    %259 = vst [vmem:[%s236] ss:$4 sm:$0xff] %v209
    %260 = vst [vmem:[%s238] ss:$4 sm:$0xff] %v213
    %261 = vst [vmem:[%s240] ss:$4 sm:$0xff] %v217
    %262 = vst [vmem:[%s242] ss:$4 sm:$0xff] %v206
    %263 = vst [vmem:[%s244] ss:$4 sm:$0xff] %v210
    %264 = vst [vmem:[%s246] ss:$4 sm:$0xff] %v214
    %265 = vst [vmem:[%s248] ss:$4 sm:$0xff] %v218
    %v266 = vld.sshfl [vmem:[#allocation1] sm:$0xff pattern:$0x73625140]
    %v267 = vld.sshfl [vmem:[#allocation1 + $0x8] sm:$0xff pattern:$0x73625140]
    %v268 = vld.sshfl [vmem:[#allocation1 + $0x10] sm:$0xff pattern:$0x73625140]
    %v269 = vld.sshfl [vmem:[#allocation1 + $0x18] sm:$0xff pattern:$0x73625140]
    %v270 = vld.sshfl [vmem:[#allocation1 + $0x20] sm:$0xff pattern:$0x73625140]
    %v271 = vld.sshfl [vmem:[#allocation1 + $0x28] sm:$0xff pattern:$0x73625140]
    %v272 = vld.sshfl [vmem:[#allocation1 + $0x30] sm:$0xff pattern:$0x73625140]
    %v288 = vadd.f32 %v250, %v251
    %v289 = vadd.f32 %v288, %v252
    %v290 = vadd.f32 %v289, %v253
    %v291 = vadd.f32 %v290, %v254
    %v292 = vadd.f32 %v291, %v255
    %v293 = vadd.f32 %v292, %v256
    %v294 = vadd.f32 %v293, %v257
    %v295 = vadd.f32 %v294, %v266
    %v296 = vadd.f32 %v295, %v267
    %v297 = vadd.f32 %v296, %v268
    %v298 = vadd.f32 %v297, %v269
    %v299 = vadd.f32 %v298, %v270
    %v300 = vadd.f32 %v299, %v271
    %vm301 = vcmask 64512
    %v302 = vsel %vm301, %v272, 0.0
    %v303 = vadd.f32 %v300, %v302
    %304 = vadd.xlane.f32.xlu0 %v303
    %v305 = vpop.xlane.xlu0 %304
    %v306 = vrsqrt.pop %v305
    %v307 = vmul.f32 %v306, %v305
    %v308 = vmul.f32 %v307, %v306
    %v309 = vmul.f32 0.5, %v308
    %v310 = vsub.f32 1.5, %v309
    %v311 = vmul.f32 %v306, %v310
    %v312 = vmul.f32 %v305, %v311
    %vm313 = vcmp.eq.f32.partialorder %v305, inf
    %v314 = vsel %vm313, %v305, %v312
    %vm315 = vcmp.eq.f32.partialorder %v305, 0.0
    %v316 = vand.u32 %v305, 2147483648
    %v317 = vsel %vm315, %v316, %v314
    %v318 = vadd.f32 %v317, 0.0001
    %v319 = vrcp.pop %v318
    %v320 = vmul.f32 %v318, %v319
    %v321 = vsub.f32 1.0, %v320
    %v322 = vmul.f32 %v319, %v321
    %v323 = vadd.f32 %v319, %v322
    %vm324 = vweird.f32 %v318
    %vm325 = vweird.f32 %v319
    %vm326 = vmor %vm324, %vm325
    %v327 = vsel %vm326, %v319, %v323
    %v328 = vand.u32 2147483647, %v318
    %vm329 = vcmp.eq.f32.partialorder %v328, 8.507059e+37
    %v330 = vand.u32 %v318, 2147483648
    %v331 = vor.u32 1.1754944e-38, %v330
    %v332 = vsel %vm329, %v331, %v327
    %v333 = vld [vmem:[#allocation7] sm:$0xff]
    %v334 = vld [vmem:[#allocation7 + $0x8] sm:$0xff]
    %v335 = vld [vmem:[#allocation7 + $0x10] sm:$0xff]
    %v336 = vld [vmem:[#allocation7 + $0x18] sm:$0xff]
    %v337 = vld [vmem:[#allocation7 + $0x20] sm:$0xff]
    %v338 = vld [vmem:[#allocation7 + $0x28] sm:$0xff]
    %v339 = vld [vmem:[#allocation7 + $0x30] sm:$0xff]
    %v340 = vld [vmem:[#allocation7 + $0x38] sm:$0xff]
    %v341 = vld [vmem:[#allocation7 + $0x40] sm:$0xff]
    %v342 = vld [vmem:[#allocation7 + $0x48] sm:$0xff]
    %v343 = vld [vmem:[#allocation7 + $0x50] sm:$0xff]
    %v344 = vld [vmem:[#allocation7 + $0x58] sm:$0xff]
    %v345 = vld [vmem:[#allocation7 + $0x60] sm:$0xff]
    %v346 = vld [vmem:[#allocation7 + $0x68] sm:$0xff]
    %v347 = vld [vmem:[#allocation7 + $0x70] sm:$0xff]
    %v348 = vld [vmem:[#allocation7 + $0x78] sm:$0xff]
    %v349 = vld [vmem:[#allocation7 + $0x80] sm:$0xff]
    %v350 = vld [vmem:[#allocation7 + $0x88] sm:$0xff]
    %v351 = vld [vmem:[#allocation7 + $0x90] sm:$0xff]
    %v352 = vld [vmem:[#allocation7 + $0x98] sm:$0xff]
    %v353 = vld [vmem:[#allocation7 + $0xa0] sm:$0xff]
    %v354 = vld [vmem:[#allocation7 + $0xa8] sm:$0xff]
    %v355 = vld [vmem:[#allocation7 + $0xb0] sm:$0xff]
    %v356 = vld [vmem:[#allocation7 + $0xb8] sm:$0xff]
    %v357 = vld [vmem:[#allocation7 + $0xc0] sm:$0xff]
    %v358 = vld [vmem:[#allocation7 + $0xc8] sm:$0xff]
    %v359 = vld [vmem:[#allocation7 + $0xd0] sm:$0xff]
    %v360 = vld [vmem:[#allocation7 + $0xd8] sm:$0xff]
    %v361 = vld [vmem:[#allocation7 + $0xe0] sm:$0xff]
    %v362 = vld [vmem:[#allocation7 + $0xe8] sm:$0xff]
    %v363 = vld [vmem:[#allocation7 + $0xf0] sm:$0xff]
    %v364 = vld [vmem:[#allocation7 + $0xf8] sm:$0xff]
    %v365 = vld [vmem:[#allocation7 + $0x100] sm:$0xff]
    %v366 = vld [vmem:[#allocation7 + $0x108] sm:$0xff]
    %v367 = vld [vmem:[#allocation7 + $0x110] sm:$0xff]
    %v368 = vld [vmem:[#allocation7 + $0x118] sm:$0xff]
    %v369 = vld [vmem:[#allocation7 + $0x120] sm:$0xff]
    %v370 = vld [vmem:[#allocation7 + $0x128] sm:$0xff]
    %v371 = vld [vmem:[#allocation7 + $0x130] sm:$0xff]
    %v372 = vld [vmem:[#allocation7 + $0x138] sm:$0xff]
    %v373 = vld [vmem:[#allocation7 + $0x140] sm:$0xff]
    %v374 = vld [vmem:[#allocation7 + $0x148] sm:$0xff]
    %v375 = vld [vmem:[#allocation7 + $0x150] sm:$0xff]
    %v376 = vld [vmem:[#allocation7 + $0x158] sm:$0xff]
    %v377 = vld [vmem:[#allocation7 + $0x160] sm:$0xff]
    %v378 = vld [vmem:[#allocation7 + $0x168] sm:$0xff]
    %v379 = vld [vmem:[#allocation7 + $0x170] sm:$0xff]
    %v380 = vld [vmem:[#allocation7 + $0x178] sm:$0xff]
    %v381 = vld [vmem:[#allocation7 + $0x180] sm:$0xff]
    %v382 = vld [vmem:[#allocation7 + $0x188] sm:$0xff]
    %v383 = vld [vmem:[#allocation7 + $0x190] sm:$0xff]
    %v384 = vld [vmem:[#allocation7 + $0x198] sm:$0xff]
    %v385 = vld [vmem:[#allocation7 + $0x1a0] sm:$0xff]
    %v386 = vld [vmem:[#allocation7 + $0x1a8] sm:$0xff]
    %v387 = vld [vmem:[#allocation7 + $0x1b0] sm:$0xff]
    %v388 = vld [vmem:[#allocation7 + $0x1b8] sm:$0xff]
    %v389 = vld [vmem:[#allocation7 + $0x1c0] sm:$0xff]
    %v390 = vld [vmem:[#allocation7 + $0x1c8] sm:$0xff]
    %v391 = vld [vmem:[#allocation7 + $0x1d0] sm:$0xff]
    %v392 = vld [vmem:[#allocation7 + $0x1d8] sm:$0xff]
    %v393 = vld [vmem:[#allocation7 + $0x1e0] sm:$0xff]
    %v394 = vld [vmem:[#allocation7 + $0x1e8] sm:$0xff]
    %v395 = vld [vmem:[#allocation7 + $0x1f0] sm:$0xff]
    %v396 = vld [vmem:[#allocation7 + $0x1f8] sm:$0xff]
    %v397 = vld [vmem:[#allocation7 + $0x200] sm:$0xff]
    %v398 = vld [vmem:[#allocation7 + $0x208] sm:$0xff]
    %v399 = vld [vmem:[#allocation7 + $0x210] sm:$0xff]
    %v400 = vld [vmem:[#allocation7 + $0x218] sm:$0xff]
    %v401 = vld [vmem:[#allocation7 + $0x220] sm:$0xff]
    %v402 = vld [vmem:[#allocation7 + $0x228] sm:$0xff]
    %v403 = vld [vmem:[#allocation7 + $0x230] sm:$0xff]
    %v404 = vld [vmem:[#allocation7 + $0x238] sm:$0xff]
    %v405 = vld [vmem:[#allocation7 + $0x240] sm:$0xff]
    %v406 = vld [vmem:[#allocation7 + $0x248] sm:$0xff]
    %v407 = vld [vmem:[#allocation7 + $0x250] sm:$0xff]
    %v408 = vld [vmem:[#allocation7 + $0x258] sm:$0xff]
    %v409 = vld [vmem:[#allocation7 + $0x260] sm:$0xff]
    %v410 = vld [vmem:[#allocation7 + $0x268] sm:$0xff]
    %v411 = vld [vmem:[#allocation7 + $0x270] sm:$0xff]
    %v412 = vld [vmem:[#allocation7 + $0x278] sm:$0xff]
    %v413 = vld [vmem:[#allocation7 + $0x280] sm:$0xff]
    %v414 = vld [vmem:[#allocation7 + $0x288] sm:$0xff]
    %v415 = vld [vmem:[#allocation7 + $0x290] sm:$0xff]
    %v416 = vld [vmem:[#allocation7 + $0x298] sm:$0xff]
    %v417 = vld [vmem:[#allocation7 + $0x2a0] sm:$0xff]
    %v418 = vld [vmem:[#allocation7 + $0x2a8] sm:$0xff]
    %v419 = vld [vmem:[#allocation7 + $0x2b0] sm:$0xff]
    %v420 = vld [vmem:[#allocation7 + $0x2b8] sm:$0xff]
    %v421 = vld [vmem:[#allocation7 + $0x2c0] sm:$0xff]
    %v422 = vld [vmem:[#allocation7 + $0x2c8] sm:$0xff]
    %v423 = vld [vmem:[#allocation7 + $0x2d0] sm:$0xff]
    %v424 = vld [vmem:[#allocation7 + $0x2d8] sm:$0xff]
    %v425 = vld [vmem:[#allocation7 + $0x2e0] sm:$0xff]
    %v426 = vld [vmem:[#allocation7 + $0x2e8] sm:$0xff]
    %v427 = vld [vmem:[#allocation7 + $0x2f0] sm:$0xff]
    %v428 = vld [vmem:[#allocation7 + $0x2f8] sm:$0xff]
    %v429 = vld [vmem:[#allocation7 + $0x300] sm:$0xff]
    %v430 = vld [vmem:[#allocation7 + $0x308] sm:$0xff]
    %v431 = vld [vmem:[#allocation7 + $0x310] sm:$0xff]
    %v432 = vld [vmem:[#allocation7 + $0x318] sm:$0xff]
    %v433 = vld [vmem:[#allocation7 + $0x320] sm:$0xff]
    %v434 = vld [vmem:[#allocation7 + $0x328] sm:$0xff]
    %v435 = vld [vmem:[#allocation7 + $0x330] sm:$0xff]
    %v436 = vld [vmem:[#allocation7 + $0x338] sm:$0xff]
    %v437 = vld [vmem:[#allocation7 + $0x340] sm:$0xff]
    %v438 = vld [vmem:[#allocation7 + $0x348] sm:$0xff]
    %v439 = vld [vmem:[#allocation7 + $0x350] sm:$0xff]
    %v440 = vld [vmem:[#allocation7 + $0x358] sm:$0xff]
    %v441 = vld [vmem:[#allocation7 + $0x360] sm:$0xff]
    %v442 = vld [vmem:[#allocation7 + $0x368] sm:$0xff]
    %v443 = vld [vmem:[#allocation7 + $0x370] sm:$0xff]
    %v444 = vld [vmem:[#allocation7 + $0x378] sm:$0xff]
    %v445 = vld [vmem:[#allocation7 + $0x380] sm:$0xff]
    %v446 = vld [vmem:[#allocation7 + $0x388] sm:$0xff]
    %v447 = vld [vmem:[#allocation7 + $0x390] sm:$0xff]
    %v448 = vld [vmem:[#allocation7 + $0x398] sm:$0xff]
    %v449 = vld [vmem:[#allocation7 + $0x3a0] sm:$0xff]
    %v450 = vld [vmem:[#allocation7 + $0x3a8] sm:$0xff]
    %v451 = vld [vmem:[#allocation7 + $0x3b0] sm:$0xff]
    %v452 = vld [vmem:[#allocation7 + $0x3b8] sm:$0xff]
    %v453 = vld [vmem:[#allocation7 + $0x3c0] sm:$0xff]
    %v454 = vld [vmem:[#allocation7 + $0x3c8] sm:$0xff]
    %v455 = vld [vmem:[#allocation7 + $0x3d0] sm:$0xff]
    %v456 = vld [vmem:[#allocation7 + $0x3d8] sm:$0xff]
    %v457 = vld [vmem:[#allocation7 + $0x3e0] sm:$0xff]
    %v458 = vld [vmem:[#allocation7 + $0x3e8] sm:$0xff]
    %v459 = vld [vmem:[#allocation7 + $0x3f0] sm:$0xff]
    %v460 = vld [vmem:[#allocation7 + $0x3f8] sm:$0xff]
    %v461 = vld [vmem:[#allocation7 + $0x400] sm:$0xff]
    %v462 = vld [vmem:[#allocation7 + $0x408] sm:$0xff]
    %v463 = vld [vmem:[#allocation7 + $0x410] sm:$0xff]
    %v464 = vld [vmem:[#allocation7 + $0x418] sm:$0xff]
    %v465 = vld [vmem:[#allocation7 + $0x420] sm:$0xff]
    %v466 = vld [vmem:[#allocation7 + $0x428] sm:$0xff]
    %v467 = vld [vmem:[#allocation7 + $0x430] sm:$0xff]
    %v468 = vld [vmem:[#allocation7 + $0x438] sm:$0xff]
    %v469 = vld [vmem:[#allocation7 + $0x440] sm:$0xff]
    %v470 = vld [vmem:[#allocation7 + $0x448] sm:$0xff]
    %v471 = vld [vmem:[#allocation7 + $0x450] sm:$0xff]
    %v472 = vld [vmem:[#allocation7 + $0x458] sm:$0xff]
    %v473 = vld [vmem:[#allocation7 + $0x460] sm:$0xff]
    %v474 = vld [vmem:[#allocation7 + $0x468] sm:$0xff]
    %v475 = vld [vmem:[#allocation7 + $0x470] sm:$0xff]
    %v476 = vld [vmem:[#allocation7 + $0x478] sm:$0xff]
    %v477 = vld [vmem:[#allocation7 + $0x480] sm:$0xff]
    %v478 = vld [vmem:[#allocation7 + $0x488] sm:$0xff]
    %v479 = vld [vmem:[#allocation7 + $0x490] sm:$0xff]
    %v480 = vld [vmem:[#allocation7 + $0x498] sm:$0xff]
    %v481 = vld [vmem:[#allocation7 + $0x4a0] sm:$0xff]
    %v482 = vld [vmem:[#allocation7 + $0x4a8] sm:$0xff]
    %v483 = vld [vmem:[#allocation7 + $0x4b0] sm:$0xff]
    %v484 = vld [vmem:[#allocation7 + $0x4b8] sm:$0xff]
    %v485 = vld [vmem:[#allocation7 + $0x4c0] sm:$0xff]
    %v486 = vld [vmem:[#allocation7 + $0x4c8] sm:$0xff]
    %v487 = vld [vmem:[#allocation7 + $0x4d0] sm:$0xff]
    %v488 = vld [vmem:[#allocation7 + $0x4d8] sm:$0xff]
    %v489 = vld [vmem:[#allocation7 + $0x4e0] sm:$0xff]
    %v490 = vld [vmem:[#allocation7 + $0x4e8] sm:$0xff]
    %v491 = vld [vmem:[#allocation7 + $0x4f0] sm:$0xff]
    %v492 = vld [vmem:[#allocation7 + $0x4f8] sm:$0xff]
    %v493 = vld [vmem:[#allocation7 + $0x500] sm:$0xff]
    %v494 = vld [vmem:[#allocation7 + $0x508] sm:$0xff]
    %v495 = vld [vmem:[#allocation7 + $0x510] sm:$0xff]
    %v496 = vld [vmem:[#allocation7 + $0x518] sm:$0xff]
    %v497 = vld [vmem:[#allocation7 + $0x520] sm:$0xff]
    %v498 = vld [vmem:[#allocation7 + $0x528] sm:$0xff]
    %v499 = vld [vmem:[#allocation7 + $0x530] sm:$0xff]
    %v500 = vld [vmem:[#allocation7 + $0x538] sm:$0xff]
    %v501 = vld [vmem:[#allocation7 + $0x540] sm:$0xff]
    %v502 = vld [vmem:[#allocation7 + $0x548] sm:$0xff]
    %v503 = vld [vmem:[#allocation7 + $0x550] sm:$0xff]
    %v504 = vld [vmem:[#allocation7 + $0x558] sm:$0xff]
    %v505 = vld [vmem:[#allocation7 + $0x560] sm:$0xff]
    %v506 = vld [vmem:[#allocation7 + $0x568] sm:$0xff]
    %v507 = vld [vmem:[#allocation7 + $0x570] sm:$0xff]
    %v508 = vld [vmem:[#allocation7 + $0x578] sm:$0xff]
    %v509 = vld [vmem:[#allocation7 + $0x580] sm:$0xff]
    %v510 = vld [vmem:[#allocation7 + $0x588] sm:$0xff]
    %v511 = vld [vmem:[#allocation7 + $0x590] sm:$0xff]
    %v512 = vld [vmem:[#allocation7 + $0x598] sm:$0xff]
    %v513 = vld [vmem:[#allocation7 + $0x5a0] sm:$0xff]
    %v514 = vld [vmem:[#allocation7 + $0x5a8] sm:$0xff]
    %v515 = vld [vmem:[#allocation7 + $0x5b0] sm:$0xff]
    %v516 = vld [vmem:[#allocation7 + $0x5b8] sm:$0xff]
    %v517 = vld [vmem:[#allocation7 + $0x5c0] sm:$0xff]
    %v518 = vld [vmem:[#allocation7 + $0x5c8] sm:$0xff]
    %v519 = vld [vmem:[#allocation7 + $0x5d0] sm:$0xff]
    %v520 = vld [vmem:[#allocation7 + $0x5d8] sm:$0xff]
    %v521 = vld [vmem:[#allocation7 + $0x5e0] sm:$0xff]
    %v522 = vld [vmem:[#allocation7 + $0x5e8] sm:$0xff]
    %v523 = vld [vmem:[#allocation7 + $0x5f0] sm:$0xff]
    %v524 = vld [vmem:[#allocation7 + $0x5f8] sm:$0xff]
    %v525 = vld [vmem:[#allocation7 + $0x600] sm:$0xff]
    %v526 = vld [vmem:[#allocation7 + $0x608] sm:$0xff]
    %v527 = vld [vmem:[#allocation7 + $0x610] sm:$0xff]
    %v528 = vld [vmem:[#allocation7 + $0x618] sm:$0xff]
    %v529 = vld [vmem:[#allocation7 + $0x620] sm:$0xff]
    %v530 = vld [vmem:[#allocation7 + $0x628] sm:$0xff]
    %v531 = vld [vmem:[#allocation7 + $0x630] sm:$0xff]
    %v532 = vld [vmem:[#allocation7 + $0x638] sm:$0xff]
    %v533 = vld [vmem:[#allocation7 + $0x640] sm:$0xff]
    %v534 = vld [vmem:[#allocation7 + $0x648] sm:$0xff]
    %v535 = vld [vmem:[#allocation7 + $0x650] sm:$0xff]
    %v536 = vld [vmem:[#allocation7 + $0x658] sm:$0xff]
    %v537 = vld [vmem:[#allocation7 + $0x660] sm:$0xff]
    %v538 = vld [vmem:[#allocation7 + $0x668] sm:$0xff]
    %v539 = vld [vmem:[#allocation7 + $0x670] sm:$0xff]
    %v540 = vld [vmem:[#allocation7 + $0x678] sm:$0xff]
    %v541 = vld [vmem:[#allocation7 + $0x680] sm:$0xff]
    %v542 = vld [vmem:[#allocation7 + $0x688] sm:$0xff]
    %v543 = vld [vmem:[#allocation7 + $0x690] sm:$0xff]
    %v544 = vld [vmem:[#allocation7 + $0x698] sm:$0xff]
    %v545 = vld [vmem:[#allocation7 + $0x6a0] sm:$0xff]
    %v546 = vld [vmem:[#allocation7 + $0x6a8] sm:$0xff]
    %v547 = vld [vmem:[#allocation7 + $0x6b0] sm:$0xff]
    %v548 = vld [vmem:[#allocation7 + $0x6b8] sm:$0xff]
    %v549 = vld [vmem:[#allocation7 + $0x6c0] sm:$0xff]
    %v550 = vld [vmem:[#allocation7 + $0x6c8] sm:$0xff]
    %v551 = vld [vmem:[#allocation7 + $0x6d0] sm:$0xff]
    %v552 = vld [vmem:[#allocation7 + $0x6d8] sm:$0xff]
    %v553 = vld [vmem:[#allocation7 + $0x6e0] sm:$0xff]
    %v554 = vld [vmem:[#allocation7 + $0x6e8] sm:$0xff]
    %v555 = vld [vmem:[#allocation7 + $0x6f0] sm:$0xff]
    %v556 = vld [vmem:[#allocation7 + $0x6f8] sm:$0xff]
    %v557 = vld [vmem:[#allocation7 + $0x700] sm:$0xff]
    %574 = vst [vmem:[#allocation1] ss:$4 sm:$0xff] %v63
    %s575 = scalar_lea.vmem [#allocation1], 1
    %576 = vst [vmem:[%s575] ss:$4 sm:$0xff] %v67
    %s577 = scalar_lea.vmem [#allocation1], 2
    %578 = vst [vmem:[%s577] ss:$4 sm:$0xff] %v71
    %s579 = scalar_lea.vmem [#allocation1], 3
    %580 = vst [vmem:[%s579] ss:$4 sm:$0xff] %v75
    %s581 = scalar_lea.vmem [#allocation1], 32
    %582 = vst [vmem:[%s581] ss:$4 sm:$0xff] %v64
    %s583 = scalar_lea.vmem [#allocation1], 33
    %584 = vst [vmem:[%s583] ss:$4 sm:$0xff] %v68
    %s585 = scalar_lea.vmem [#allocation1], 34
    %586 = vst [vmem:[%s585] ss:$4 sm:$0xff] %v72
    %s587 = scalar_lea.vmem [#allocation1], 35
    %588 = vst [vmem:[%s587] ss:$4 sm:$0xff] %v76
    %v589 = vld.sshfl [vmem:[#allocation1] sm:$0xff pattern:$0x73625140]
    %v590 = vld.sshfl [vmem:[#allocation1 + $0x8] sm:$0xff pattern:$0x73625140]
    %v591 = vld.sshfl [vmem:[#allocation1 + $0x10] sm:$0xff pattern:$0x73625140]
    %v592 = vld.sshfl [vmem:[#allocation1 + $0x18] sm:$0xff pattern:$0x73625140]
    %v593 = vld.sshfl [vmem:[#allocation1 + $0x20] sm:$0xff pattern:$0x73625140]
    %v594 = vld.sshfl [vmem:[#allocation1 + $0x28] sm:$0xff pattern:$0x73625140]
    %v595 = vld.sshfl [vmem:[#allocation1 + $0x30] sm:$0xff pattern:$0x73625140]
    %v596 = vld.sshfl [vmem:[#allocation1 + $0x38] sm:$0xff pattern:$0x73625140]
    %597 = vst [vmem:[#allocation1] ss:$4 sm:$0xff] %v65
    %598 = vst [vmem:[%s575] ss:$4 sm:$0xff] %v69
    %599 = vst [vmem:[%s577] ss:$4 sm:$0xff] %v73
    %600 = vst [vmem:[%s579] ss:$4 sm:$0xff] %v77
    %601 = vst [vmem:[%s581] ss:$4 sm:$0xff] %v66
    %602 = vst [vmem:[%s583] ss:$4 sm:$0xff] %v70
    %603 = vst [vmem:[%s585] ss:$4 sm:$0xff] %v74
    %604 = vst [vmem:[%s587] ss:$4 sm:$0xff] %v78
    %v605 = vld.sshfl [vmem:[#allocation1] sm:$0xff pattern:$0x73625140]
    %v606 = vld.sshfl [vmem:[#allocation1 + $0x8] sm:$0xff pattern:$0x73625140]
    %v607 = vld.sshfl [vmem:[#allocation1 + $0x10] sm:$0xff pattern:$0x73625140]
    %v608 = vld.sshfl [vmem:[#allocation1 + $0x18] sm:$0xff pattern:$0x73625140]
    %v609 = vld.sshfl [vmem:[#allocation1 + $0x20] sm:$0xff pattern:$0x73625140]
    %v610 = vld.sshfl [vmem:[#allocation1 + $0x28] sm:$0xff pattern:$0x73625140]
    %v611 = vld.sshfl [vmem:[#allocation1 + $0x30] sm:$0xff pattern:$0x73625140]
    %v626 = vsel %vm301, %v611, 0
    %628 = vmatpush.msra.mxu0 %v348
    %629 = vmatpush.msra.mxu0 %v347
    %630 = vmatpush.msra.mxu0 %v346
    %631 = vmatpush.msra.mxu0 %v345
    %632 = vmatpush.msra.mxu0 %v344
    %633 = vmatpush.msra.mxu0 %v343
    %634 = vmatpush.msra.mxu0 %v342
    %635 = vmatpush.msra.mxu0 %v341
    %636 = vmatpush.msra.mxu0 %v340
    %637 = vmatpush.msra.mxu0 %v339
    %638 = vmatpush.msra.mxu0 %v338
    %639 = vmatpush.msra.mxu0 %v337
    %640 = vmatpush.msra.mxu0 %v336
    %641 = vmatpush.msra.mxu0 %v335
    %642 = vmatpush.msra.mxu0 %v334
    %643 = vmatpush.msra.mxu0 %v333
    %644 = vmatmul.f32.gmra.mxu0 %v589
    %v645 = vpop.f32.mrf.mxu0
    %v646 = vadd.f32 0.0, %v645
    %647 = vdwg.mxu0
    %648 = vmatpush.msra.mxu0 %v364
    %649 = vmatpush.msra.mxu0 %v363
    %650 = vmatpush.msra.mxu0 %v362
    %651 = vmatpush.msra.mxu0 %v361
    %652 = vmatpush.msra.mxu0 %v360
    %653 = vmatpush.msra.mxu0 %v359
    %654 = vmatpush.msra.mxu0 %v358
    %655 = vmatpush.msra.mxu0 %v357
    %656 = vmatpush.msra.mxu0 %v356
    %657 = vmatpush.msra.mxu0 %v355
    %658 = vmatpush.msra.mxu0 %v354
    %659 = vmatpush.msra.mxu0 %v353
    %660 = vmatpush.msra.mxu0 %v352
    %661 = vmatpush.msra.mxu0 %v351
    %662 = vmatpush.msra.mxu0 %v350
    %663 = vmatpush.msra.mxu0 %v349
    %664 = vmatmul.f32.gmra.mxu0 %v590
    %v665 = vpop.f32.mrf.mxu0
    %v666 = vadd.f32 %v646, %v665
    %667 = vdwg.mxu0
    %668 = vmatpush.msra.mxu0 %v380
    %669 = vmatpush.msra.mxu0 %v379
    %670 = vmatpush.msra.mxu0 %v378
    %671 = vmatpush.msra.mxu0 %v377
    %672 = vmatpush.msra.mxu0 %v376
    %673 = vmatpush.msra.mxu0 %v375
    %674 = vmatpush.msra.mxu0 %v374
    %675 = vmatpush.msra.mxu0 %v373
    %676 = vmatpush.msra.mxu0 %v372
    %677 = vmatpush.msra.mxu0 %v371
    %678 = vmatpush.msra.mxu0 %v370
    %679 = vmatpush.msra.mxu0 %v369
    %680 = vmatpush.msra.mxu0 %v368
    %681 = vmatpush.msra.mxu0 %v367
    %682 = vmatpush.msra.mxu0 %v366
    %683 = vmatpush.msra.mxu0 %v365
    %684 = vmatmul.f32.gmra.mxu0 %v591
    %v685 = vpop.f32.mrf.mxu0
    %v686 = vadd.f32 %v666, %v685
    %687 = vdwg.mxu0
    %688 = vmatpush.msra.mxu0 %v396
    %689 = vmatpush.msra.mxu0 %v395
    %690 = vmatpush.msra.mxu0 %v394
    %691 = vmatpush.msra.mxu0 %v393
    %692 = vmatpush.msra.mxu0 %v392
    %693 = vmatpush.msra.mxu0 %v391
    %694 = vmatpush.msra.mxu0 %v390
    %695 = vmatpush.msra.mxu0 %v389
    %696 = vmatpush.msra.mxu0 %v388
    %697 = vmatpush.msra.mxu0 %v387
    %698 = vmatpush.msra.mxu0 %v386
    %699 = vmatpush.msra.mxu0 %v385
    %700 = vmatpush.msra.mxu0 %v384
    %701 = vmatpush.msra.mxu0 %v383
    %702 = vmatpush.msra.mxu0 %v382
    %703 = vmatpush.msra.mxu0 %v381
    %704 = vmatmul.f32.gmra.mxu0 %v592
    %v705 = vpop.f32.mrf.mxu0
    %v706 = vadd.f32 %v686, %v705
    %707 = vdwg.mxu0
    %708 = vmatpush.msra.mxu0 %v412
    %709 = vmatpush.msra.mxu0 %v411
    %710 = vmatpush.msra.mxu0 %v410
    %711 = vmatpush.msra.mxu0 %v409
    %712 = vmatpush.msra.mxu0 %v408
    %713 = vmatpush.msra.mxu0 %v407
    %714 = vmatpush.msra.mxu0 %v406
    %715 = vmatpush.msra.mxu0 %v405
    %716 = vmatpush.msra.mxu0 %v404
    %717 = vmatpush.msra.mxu0 %v403
    %718 = vmatpush.msra.mxu0 %v402
    %719 = vmatpush.msra.mxu0 %v401
    %720 = vmatpush.msra.mxu0 %v400
    %721 = vmatpush.msra.mxu0 %v399
    %722 = vmatpush.msra.mxu0 %v398
    %723 = vmatpush.msra.mxu0 %v397
    %724 = vmatmul.f32.gmra.mxu0 %v593
    %v725 = vpop.f32.mrf.mxu0
    %v726 = vadd.f32 %v706, %v725
    %727 = vdwg.mxu0
    %728 = vmatpush.msra.mxu0 %v428
    %729 = vmatpush.msra.mxu0 %v427
    %730 = vmatpush.msra.mxu0 %v426
    %731 = vmatpush.msra.mxu0 %v425
    %732 = vmatpush.msra.mxu0 %v424
    %733 = vmatpush.msra.mxu0 %v423
    %734 = vmatpush.msra.mxu0 %v422
    %735 = vmatpush.msra.mxu0 %v421
    %736 = vmatpush.msra.mxu0 %v420
    %737 = vmatpush.msra.mxu0 %v419
    %738 = vmatpush.msra.mxu0 %v418
    %739 = vmatpush.msra.mxu0 %v417
    %740 = vmatpush.msra.mxu0 %v416
    %741 = vmatpush.msra.mxu0 %v415
    %742 = vmatpush.msra.mxu0 %v414
    %743 = vmatpush.msra.mxu0 %v413
    %744 = vmatmul.f32.gmra.mxu0 %v594
    %v745 = vpop.f32.mrf.mxu0
    %v746 = vadd.f32 %v726, %v745
    %747 = vdwg.mxu0
    %748 = vmatpush.msra.mxu0 %v444
    %749 = vmatpush.msra.mxu0 %v443
    %750 = vmatpush.msra.mxu0 %v442
    %751 = vmatpush.msra.mxu0 %v441
    %752 = vmatpush.msra.mxu0 %v440
    %753 = vmatpush.msra.mxu0 %v439
    %754 = vmatpush.msra.mxu0 %v438
    %755 = vmatpush.msra.mxu0 %v437
    %756 = vmatpush.msra.mxu0 %v436
    %757 = vmatpush.msra.mxu0 %v435
    %758 = vmatpush.msra.mxu0 %v434
    %759 = vmatpush.msra.mxu0 %v433
    %760 = vmatpush.msra.mxu0 %v432
    %761 = vmatpush.msra.mxu0 %v431
    %762 = vmatpush.msra.mxu0 %v430
    %763 = vmatpush.msra.mxu0 %v429
    %764 = vmatmul.f32.gmra.mxu0 %v595
    %v765 = vpop.f32.mrf.mxu0
    %v766 = vadd.f32 %v746, %v765
    %767 = vdwg.mxu0
    %768 = vmatpush.msra.mxu0 %v460
    %769 = vmatpush.msra.mxu0 %v459
    %770 = vmatpush.msra.mxu0 %v458
    %771 = vmatpush.msra.mxu0 %v457
    %772 = vmatpush.msra.mxu0 %v456
    %773 = vmatpush.msra.mxu0 %v455
    %774 = vmatpush.msra.mxu0 %v454
    %775 = vmatpush.msra.mxu0 %v453
    %776 = vmatpush.msra.mxu0 %v452
    %777 = vmatpush.msra.mxu0 %v451
    %778 = vmatpush.msra.mxu0 %v450
    %779 = vmatpush.msra.mxu0 %v449
    %780 = vmatpush.msra.mxu0 %v448
    %781 = vmatpush.msra.mxu0 %v447
    %782 = vmatpush.msra.mxu0 %v446
    %783 = vmatpush.msra.mxu0 %v445
    %784 = vmatmul.f32.gmra.mxu0 %v596
    %v785 = vpop.f32.mrf.mxu0
    %v786 = vadd.f32 %v766, %v785
    %787 = vdwg.mxu0
    %788 = vmatpush.msra.mxu0 %v476
    %789 = vmatpush.msra.mxu0 %v475
    %790 = vmatpush.msra.mxu0 %v474
    %791 = vmatpush.msra.mxu0 %v473
    %792 = vmatpush.msra.mxu0 %v472
    %793 = vmatpush.msra.mxu0 %v471
    %794 = vmatpush.msra.mxu0 %v470
    %795 = vmatpush.msra.mxu0 %v469
    %796 = vmatpush.msra.mxu0 %v468
    %797 = vmatpush.msra.mxu0 %v467
    %798 = vmatpush.msra.mxu0 %v466
    %799 = vmatpush.msra.mxu0 %v465
    %800 = vmatpush.msra.mxu0 %v464
    %801 = vmatpush.msra.mxu0 %v463
    %802 = vmatpush.msra.mxu0 %v462
    %803 = vmatpush.msra.mxu0 %v461
    %804 = vmatmul.f32.gmra.mxu0 %v605
    %v805 = vpop.f32.mrf.mxu0
    %v806 = vadd.f32 %v786, %v805
    %807 = vdwg.mxu0
    %808 = vmatpush.msra.mxu0 %v492
    %809 = vmatpush.msra.mxu0 %v491
    %810 = vmatpush.msra.mxu0 %v490
    %811 = vmatpush.msra.mxu0 %v489
    %812 = vmatpush.msra.mxu0 %v488
    %813 = vmatpush.msra.mxu0 %v487
    %814 = vmatpush.msra.mxu0 %v486
    %815 = vmatpush.msra.mxu0 %v485
    %816 = vmatpush.msra.mxu0 %v484
    %817 = vmatpush.msra.mxu0 %v483
    %818 = vmatpush.msra.mxu0 %v482
    %819 = vmatpush.msra.mxu0 %v481
    %820 = vmatpush.msra.mxu0 %v480
    %821 = vmatpush.msra.mxu0 %v479
    %822 = vmatpush.msra.mxu0 %v478
    %823 = vmatpush.msra.mxu0 %v477
    %824 = vmatmul.f32.gmra.mxu0 %v606
    %v825 = vpop.f32.mrf.mxu0
    %v826 = vadd.f32 %v806, %v825
    %827 = vdwg.mxu0
    %828 = vmatpush.msra.mxu0 %v508
    %829 = vmatpush.msra.mxu0 %v507
    %830 = vmatpush.msra.mxu0 %v506
    %831 = vmatpush.msra.mxu0 %v505
    %832 = vmatpush.msra.mxu0 %v504
    %833 = vmatpush.msra.mxu0 %v503
    %834 = vmatpush.msra.mxu0 %v502
    %835 = vmatpush.msra.mxu0 %v501
    %836 = vmatpush.msra.mxu0 %v500
    %837 = vmatpush.msra.mxu0 %v499
    %838 = vmatpush.msra.mxu0 %v498
    %839 = vmatpush.msra.mxu0 %v497
    %840 = vmatpush.msra.mxu0 %v496
    %841 = vmatpush.msra.mxu0 %v495
    %842 = vmatpush.msra.mxu0 %v494
    %843 = vmatpush.msra.mxu0 %v493
    %844 = vmatmul.f32.gmra.mxu0 %v607
    %v845 = vpop.f32.mrf.mxu0
    %v846 = vadd.f32 %v826, %v845
    %847 = vdwg.mxu0
    %848 = vmatpush.msra.mxu0 %v524
    %849 = vmatpush.msra.mxu0 %v523
    %850 = vmatpush.msra.mxu0 %v522
    %851 = vmatpush.msra.mxu0 %v521
    %852 = vmatpush.msra.mxu0 %v520
    %853 = vmatpush.msra.mxu0 %v519
    %854 = vmatpush.msra.mxu0 %v518
    %855 = vmatpush.msra.mxu0 %v517
    %856 = vmatpush.msra.mxu0 %v516
    %857 = vmatpush.msra.mxu0 %v515
    %858 = vmatpush.msra.mxu0 %v514
    %859 = vmatpush.msra.mxu0 %v513
    %860 = vmatpush.msra.mxu0 %v512
    %861 = vmatpush.msra.mxu0 %v511
    %862 = vmatpush.msra.mxu0 %v510
    %863 = vmatpush.msra.mxu0 %v509
    %864 = vmatmul.f32.gmra.mxu0 %v608
    %v865 = vpop.f32.mrf.mxu0
    %v866 = vadd.f32 %v846, %v865
    %867 = vdwg.mxu0
    %868 = vmatpush.msra.mxu0 %v540
    %869 = vmatpush.msra.mxu0 %v539
    %870 = vmatpush.msra.mxu0 %v538
    %871 = vmatpush.msra.mxu0 %v537
    %872 = vmatpush.msra.mxu0 %v536
    %873 = vmatpush.msra.mxu0 %v535
    %874 = vmatpush.msra.mxu0 %v534
    %875 = vmatpush.msra.mxu0 %v533
    %876 = vmatpush.msra.mxu0 %v532
    %877 = vmatpush.msra.mxu0 %v531
    %878 = vmatpush.msra.mxu0 %v530
    %879 = vmatpush.msra.mxu0 %v529
    %880 = vmatpush.msra.mxu0 %v528
    %881 = vmatpush.msra.mxu0 %v527
    %882 = vmatpush.msra.mxu0 %v526
    %883 = vmatpush.msra.mxu0 %v525
    %884 = vmatmul.f32.gmra.mxu0 %v609
    %v885 = vpop.f32.mrf.mxu0
    %v886 = vadd.f32 %v866, %v885
    %887 = vdwg.mxu0
    %888 = vmatpush.msra.mxu0 %v556
    %889 = vmatpush.msra.mxu0 %v555
    %890 = vmatpush.msra.mxu0 %v554
    %891 = vmatpush.msra.mxu0 %v553
    %892 = vmatpush.msra.mxu0 %v552
    %893 = vmatpush.msra.mxu0 %v551
    %894 = vmatpush.msra.mxu0 %v550
    %895 = vmatpush.msra.mxu0 %v549
    %896 = vmatpush.msra.mxu0 %v548
    %897 = vmatpush.msra.mxu0 %v547
    %898 = vmatpush.msra.mxu0 %v546
    %899 = vmatpush.msra.mxu0 %v545
    %900 = vmatpush.msra.mxu0 %v544
    %901 = vmatpush.msra.mxu0 %v543
    %902 = vmatpush.msra.mxu0 %v542
    %903 = vmatpush.msra.mxu0 %v541
    %904 = vmatmul.f32.gmra.mxu0 %v610
    %v905 = vpop.f32.mrf.mxu0
    %v906 = vadd.f32 %v886, %v905
    %907 = vdwg.mxu0
    %908 = vmatpush.msra.mxu0 0.0
    %909 = vmatpush.msra.mxu0 0.0
    %910 = vmatpush.msra.mxu0 0.0
    %911 = vmatpush.msra.mxu0 0.0
    %912 = vmatpush.msra.mxu0 0.0
    %913 = vmatpush.msra.mxu0 0.0
    %914 = vmatpush.msra.mxu0 0.0
    %915 = vmatpush.msra.mxu0 0.0
    %916 = vmatpush.msra.mxu0 0.0
    %917 = vmatpush.msra.mxu0 0.0
    %918 = vmatpush.msra.mxu0 0.0
    %919 = vmatpush.msra.mxu0 0.0
    %920 = vmatpush.msra.mxu0 0.0
    %921 = vmatpush.msra.mxu0 0.0
    %922 = vmatpush.msra.mxu0 0.0
    %923 = vmatpush.msra.mxu0 %v557
    %924 = vmatmul.f32.gmra.mxu0 %v626
    %v925 = vpop.f32.mrf.mxu0
    %v926 = vadd.f32 %v906, %v925
    %927 = vdwg.mxu0
    %v928 = vmul.f32 %v926, %v332
    %v929 = vld [vmem:[%s3] sm:$0x1]
    %v931 = vperm.slane %v929, 0
    %v933 = vadd.f32 %v928, %v931
    %v934 = vmax.f32 %v933, 0.0
    %935 = vst [vmem:[#allocation8] sm:$0xff] %v934
    // Predicated region
    $region30: #{tpu_custom_call.1} parent=1 // pred_check
      _
    $region31: #{tpu_custom_call.1} parent=1 // pred_check_branch
      %937 = sbr.rel (0) target = $region33
    $region32: #{tpu_custom_call.1} parent=1 // pred_region
      %939 = vsyncadd [#allocation4], 96
      %s940 = sshll.u32 [#allocation8], 4
      %s941 = int_to_ptr.vmem [resolvable:$true] %s940
      %s942 = sshll.u32 %s4, 4
      %s943 = int_to_ptr.hbm [resolvable:$true] %s942
      %948 = dma.vmem_to_hbm [thread:$0]  %s941, 32, %s943, [#allocation4], 32, 32, 2
    $region33: #{tpu_custom_call.1} parent=1 // pred_fallthru
      _
    // Predicated region
    $region34: #{tpu_custom_call.1} parent=1 // pred_check
      _
    $region35: #{tpu_custom_call.1} parent=1 // pred_check_branch
      %950 = sbr.rel (0) target = $region37
    $region36: #{tpu_custom_call.1} parent=1 // pred_region
      %952 = dma.done [#allocation4], 128
    $region37: #{tpu_custom_call.1} parent=1 // pred_fallthru
      _
    %953 = vsyncpa [#allocation3], 1
    %954 = vsyncpa [#allocation6], 1
    %955 = vsyncpa [#allocation4], 1

</llo_original>
